<compile_context>
chip_gen: v7x
topology: tpu7x:2x2x1
jax: 0.10.0
libtpu: 0.0.40
codegen_flags: <defaults>
</compile_context>

<pallas_src>
import jax
import jax.numpy as jnp
from jax.experimental import pallas as pl
from jax.experimental.pallas import tpu as pltpu

_LANE = 128
_MIB = 1024 * 1024


def _round_up(x, m):
    return ((x + m - 1) // m) * m


def _vmem_capacity_bytes():
    """Per-core VMEM capacity; conservative 64 MiB (v7x) fallback."""
    try:
        info = pltpu.get_tpu_info()
        for name in ("vmem_capacity_bytes", "vmem_bytes", "vmem_size_bytes"):
            cap = getattr(info, name, None)
            if cap:
                return int(cap)
    except Exception:
        pass
    return 64 * _MIB


# ---------------------------------------------------------------------------
# Kernel
# ---------------------------------------------------------------------------
def _skip_linear_kernel(x_ref, w_ref, b_ref, o_ref, acc_ref):
    """out[i, j-tile] = x[i, j-tile] + sum_k x[i, k-tile] @ Wt[k-tile, j-tile] + b[j-tile]

    x_ref : (tm, tk) input block at grid (i, k)   -- original dtype
    w_ref : (tk, tn) transposed-weight block (k, j) -- MXU dtype (bf16)
    b_ref : (1,  tn) bias slice (j)                 -- f32
    o_ref : (tm, tn) output block (i, j)
    acc_ref: (tm, tn) f32 accumulator scratch (persists across the K axis)
    Requires tk == tn so the residual columns live in the k == j LHS block.
    """
    j = pl.program_id(1)
    k = pl.program_id(2)

    @pl.when(k == 0)
    def _init():
        acc_ref[...] = jnp.zeros_like(acc_ref)

    acc_ref[...] += jnp.dot(x_ref[...].astype(w_ref.dtype), w_ref[...],
                            preferred_element_type=jnp.float32)

    # Residual add in f32, taken from the already-resident LHS block at k == j
    # (zero extra HBM traffic, no duplicate operand).
    @pl.when(k == j)
    def _residual():
        acc_ref[...] += x_ref[...].astype(jnp.float32)

    @pl.when(k == pl.num_programs(2) - 1)
    def _finalize():
        o_ref[...] = (acc_ref[...] + b_ref[...]).astype(o_ref.dtype)


# ---------------------------------------------------------------------------
# Tile selection
# ---------------------------------------------------------------------------
def _pick_col_tile(d_pad):
    if d_pad <= 1024:
        return d_pad                       # single lane-dense column tile
    for t in (1024, 512, 384, 256, 128):   # prefer >= 256 (v6e/v7x 256-wide MXU)
        if d_pad % t == 0:
            return t
    return _LANE


def _pick_row_tile(n, tn, x_itemsize, w_itemsize, row_align, budget_bytes):
    def blocks_bytes(tm):
        return (tm * tn * (4 * x_itemsize + 4)      # 2x LHS blk + 2x out blk + f32 acc
                + 2 * w_itemsize * tn * tn          # 2x weight blk
                + 8 * tn)                           # 2x f32 bias row
    tm = min(2048, max(row_align, _round_up(n, row_align)))
    while tm > row_align and blocks_bytes(tm) > budget_bytes:
        tm = max(row_align, _round_up(tm // 2, row_align))
    return tm


# ---------------------------------------------------------------------------
# Wrapper
# ---------------------------------------------------------------------------
def prepare_skip_linear_params(w, b, mxu_dtype=jnp.bfloat16):
    """Transpose + zero-pad + cast the Linear weight/bias ONCE.

    Cache the result across forward calls: doing this per call costs a full
    D^2 f32 HBM round trip that can rival the kernel's own weight traffic.
    """
    w = jnp.asarray(w)
    b = jnp.asarray(b)
    d = w.shape[0]
    assert w.shape == (d, d) and b.shape == (d,)
    d_pad = _round_up(d, _LANE)
    w_t = w.T
    b_f32 = b.astype(jnp.float32)
    if d_pad != d:
        w_t = jnp.pad(w_t, ((0, d_pad - d), (0, d_pad - d)))
        b_f32 = jnp.pad(b_f32, (0, d_pad - d))
    return w_t.astype(mxu_dtype), b_f32.reshape(1, d_pad)


def skip_connection_apply(x, params, *, tile_m=None, tile_n=None, interpret=False):
    """out = x + (x @ w.T + b) using prepared (padded/transposed/bf16) params."""
    w_t, b_row = params
    d_pad = w_t.shape[0]
    if b_row.ndim == 1:
        b_row = b_row.reshape(1, -1)
    assert w_t.shape == (d_pad, d_pad) and b_row.shape == (1, d_pad)

    orig_shape = x.shape
    d = orig_shape[-1]
    assert d <= d_pad and d_pad % _LANE == 0

    x2 = x.reshape(-1, d)
    n = x2.shape[0]
    if d_pad != d:
        # The contraction dim must be exactly zero-padded (padded x columns hit
        # zero weight rows). Rows are left ragged: grid uses cdiv and OOB rows
        # in the last block are simply dropped on writeback.
        x2 = jnp.pad(x2, ((0, 0), (0, d_pad - d)))

    row_align = 16 if x2.dtype == jnp.bfloat16 else 8
    x_itemsize = jnp.dtype(x2.dtype).itemsize
    w_itemsize = jnp.dtype(w_t.dtype).itemsize

    # Generation-aware VMEM budgets (v7x: 64 MiB/core, v5e/v6e: 128 MiB).
    vmem_cap = _vmem_capacity_bytes()
    vmem_limit = min(128 * _MIB, max(32 * _MIB, vmem_cap - 16 * _MIB))
    block_budget = (3 * vmem_limit) // 4

    tn = tile_n if tile_n is not None else _pick_col_tile(d_pad)
    assert tn % _LANE == 0 and d_pad % tn == 0, \
        "tile_n must be a multiple of 128 that divides the padded hidden dim"
    tk = tn   # residual-at-(k==j) trick requires the K tile to equal the column tile

    if tile_m is not None:
        tm = max(row_align, _round_up(tile_m, row_align))
    else:
        tm = _pick_row_tile(n, tn, x_itemsize, w_itemsize, row_align, block_budget)

    grid = (pl.cdiv(n, tm), d_pad // tn, d_pad // tk)

    out = pl.pallas_call(
        _skip_linear_kernel,
        out_shape=jax.ShapeDtypeStruct((n, d_pad), x.dtype),
        grid_spec=pltpu.PrefetchScalarGridSpec(
            num_scalar_prefetch=0,
            grid=grid,
            in_specs=[
                pl.BlockSpec((tm, tk), lambda i, j, k: (i, k)),   # x: matmul LHS + residual
                pl.BlockSpec((tk, tn), lambda i, j, k: (k, j)),   # W^T tile (bf16)
                pl.BlockSpec((1, tn), lambda i, j, k: (0, j)),    # bias slice (f32)
            ],
            out_specs=pl.BlockSpec((tm, tn), lambda i, j, k: (i, j)),
            scratch_shapes=[pltpu.VMEM((tm, tn), jnp.float32)],
        ),
        compiler_params=pltpu.CompilerParams(
            # Row axis sharded across TensorCores; column + K axes stay local
            # (K is a reduction into the scratch accumulator).
            dimension_semantics=("parallel", "arbitrary", "arbitrary"),
            vmem_limit_bytes=int(vmem_limit),
        ),
        interpret=interpret,
    )(x2, w_t, b_row)

    if d_pad != d:
        out = out[:, :d]
    return out.reshape(orig_shape)


def skip_connection_forward(x, w, b, *, mxu_dtype=jnp.bfloat16, **kwargs):
    """Convenience wrapper that prepares the weight per call (prefer caching
    prepare_skip_linear_params() + skip_connection_apply() in hot loops)."""
    return skip_connection_apply(x, prepare_skip_linear_params(w, b, mxu_dtype), **kwargs)


def skip_connection_reference(x, w, b, mxu_dtype=jnp.bfloat16):
    """Same math with the same bf16-MXU / f32-residual precision split."""
    y = jnp.dot(x.astype(mxu_dtype), w.T.astype(mxu_dtype),
                preferred_element_type=jnp.float32)
    return x.astype(jnp.float32) + y + b.astype(jnp.float32)


if __name__ == "__main__":
    key = jax.random.PRNGKey(0)

    def make_inputs(k, hidden, batch=2, seq=8):
        kx, kw, kb = jax.random.split(k, 3)
        bound = 1.0 / (hidden ** 0.5)
        x = jax.random.normal(kx, (batch, seq, hidden), dtype=jnp.float32)
        w = jax.random.uniform(kw, (hidden, hidden), jnp.float32, -bound, bound)
        b = jax.random.uniform(kb, (hidden,), jnp.float32, -bound, bound)
        return x, w, b

    k1, k2, k3 = jax.random.split(key, 3)

    # 1) Shape implied by the module: batch=2, seq=8, hidden=32.
    #    hidden padded to one 128-lane tile; all 16 rows in a single grid step.
    #    Uses the cached-params path (weight prepared once).
    x, w, b = make_inputs(k1, 32)
    params = prepare_skip_linear_params(w, b)
    out = skip_connection_apply(x, params)
    jax.block_until_ready(out)
    assert out.shape == x.shape and out.dtype == x.dtype
    ref = skip_connection_reference(x, w, b)
    assert jnp.allclose(out, ref, atol=1e-3, rtol=1e-3), "mismatch vs bf16-MXU reference"
    ref_f32 = x + (x @ w.T + b)   # original full-f32 module semantics (loose check)
    assert jnp.allclose(out, ref_f32, atol=1e-1, rtol=1e-1), "mismatch vs f32 reference"

    # 2) Exercise the K-tiled accumulator + residual-at-(k==j) path:
    #    hidden=256 split into 128-wide column/K tiles, two row tiles.
    x2_, w2_, b2_ = make_inputs(k2, 256)
    out2 = skip_connection_forward(x2_, w2_, b2_, tile_m=8, tile_n=128)
    jax.block_until_ready(out2)
    ref2 = skip_connection_reference(x2_, w2_, b2_)
    assert jnp.allclose(out2, ref2, atol=1e-3, rtol=1e-3), "mismatch vs reference (K-tiled)"

    # 3) Ragged row count (no row padding; OOB rows dropped) with an already
    #    lane-aligned hidden dim (no host-side pad or slice copies at all).
    x3_, w3_, b3_ = make_inputs(k3, 128, batch=3, seq=4)   # n = 12 rows, tm = 8
    out3 = skip_connection_forward(x3_, w3_, b3_, tile_m=8)
    jax.block_until_ready(out3)
    ref3 = skip_connection_reference(x3_, w3_, b3_)
    assert jnp.allclose(out3, ref3, atol=1e-3, rtol=1e-3), "mismatch vs reference (ragged rows)"

    print("KERNEL_OK")
</pallas_src>

<mosaic_0001>
module attributes {stable_mosaic.version = 11 : i64} {
  func.func @_skip_linear_kernel(%arg0: i32, %arg1: i32, %arg2: i32, %arg3: memref<16x128xf32, #tpu.memory_space<vmem>>, %arg4: memref<128x128xbf16, #tpu.memory_space<vmem>>, %arg5: memref<1x128xf32, #tpu.memory_space<vmem>>, %arg6: memref<16x128xf32, #tpu.memory_space<vmem>>, %arg7: memref<16x128xf32, #tpu.memory_space<vmem>>) attributes {dimension_semantics = [#tpu.dimension_semantics<parallel>, #tpu.dimension_semantics<arbitrary>, #tpu.dimension_semantics<arbitrary>], iteration_bounds = array<i64: 1, 1, 1>, scalar_prefetch = 0 : i64, scratch_operands = 1 : i64, tpu.core_type = #tpu.core_type<tc>, window_params = [{transform_indices = @transform_0, window_bounds = array<i64: 16, 128>}, {transform_indices = @transform_1, window_bounds = array<i64: 128, 128>}, {transform_indices = @transform_2, window_bounds = array<i64: 1, 128>}, {transform_indices = @transform_3, window_bounds = array<i64: 16, 128>}]} {
    %c0_i32 = arith.constant 0 : i32
    %0 = arith.cmpi eq, %arg2, %c0_i32 : i32
    %1 = arith.extui %0 : i1 to i32
    %c0_i32_0 = arith.constant 0 : i32
    %2 = arith.cmpi ne, %1, %c0_i32_0 : i32
    scf.if %2 {
      %cst_11 = arith.constant 0.000000e+00 : f32
      %16 = vector.broadcast %cst_11 : f32 to vector<16x128xf32>
      %c0_12 = arith.constant 0 : index
      %c0_13 = arith.constant 0 : index
      %17 = vector.load %arg7[%c0_12, %c0_13] : memref<16x128xf32, #tpu.memory_space<vmem>>, vector<16x128xf32>
      tpu.vector_store %arg7[%c0_12, %c0_13], %16 {strides = array<i32>} : memref<16x128xf32, #tpu.memory_space<vmem>>, vector<16x128xf32>,
    } else {
    }
    %c0 = arith.constant 0 : index
    %c0_1 = arith.constant 0 : index
    %3 = vector.load %arg7[%c0, %c0_1] : memref<16x128xf32, #tpu.memory_space<vmem>>, vector<16x128xf32>
    %c0_2 = arith.constant 0 : index
    %c0_3 = arith.constant 0 : index
    %4 = vector.load %arg3[%c0_2, %c0_3] : memref<16x128xf32, #tpu.memory_space<vmem>>, vector<16x128xf32>
    %5 = arith.truncf %4 : vector<16x128xf32> to vector<16x128xbf16>
    %c0_4 = arith.constant 0 : index
    %c0_5 = arith.constant 0 : index
    %6 = vector.load %arg4[%c0_4, %c0_5] : memref<128x128xbf16, #tpu.memory_space<vmem>>, vector<128x128xbf16>
    %cst = arith.constant dense<0.000000e+00> : vector<16x128xf32>
    %7 = tpu.matmul %5, %6, %cst {dimension_numbers = #tpu.dot_dimension_numbers<[1], [0], [0], [1], [0, 0, 1, 1], [], []>} : vector<16x128xbf16>, vector<128x128xbf16>, vector<16x128xf32> -> vector<16x128xf32>
    %8 = arith.addf %3, %7 : vector<16x128xf32>
    %c0_6 = arith.constant 0 : index
    %c0_7 = arith.constant 0 : index
    %9 = vector.load %arg7[%c0_6, %c0_7] : memref<16x128xf32, #tpu.memory_space<vmem>>, vector<16x128xf32>
    tpu.vector_store %arg7[%c0_6, %c0_7], %8 {strides = array<i32>} : memref<16x128xf32, #tpu.memory_space<vmem>>, vector<16x128xf32>,
    %10 = arith.cmpi eq, %arg2, %arg1 : i32
    %11 = arith.extui %10 : i1 to i32
    %c0_i32_8 = arith.constant 0 : i32
    %12 = arith.cmpi ne, %11, %c0_i32_8 : i32
    scf.if %12 {
      %c0_11 = arith.constant 0 : index
      %c0_12 = arith.constant 0 : index
      %16 = vector.load %arg7[%c0_11, %c0_12] : memref<16x128xf32, #tpu.memory_space<vmem>>, vector<16x128xf32>
      %c0_13 = arith.constant 0 : index
      %c0_14 = arith.constant 0 : index
      %17 = vector.load %arg3[%c0_13, %c0_14] : memref<16x128xf32, #tpu.memory_space<vmem>>, vector<16x128xf32>
      %18 = arith.addf %16, %17 : vector<16x128xf32>
      %c0_15 = arith.constant 0 : index
      %c0_16 = arith.constant 0 : index
      %19 = vector.load %arg7[%c0_15, %c0_16] : memref<16x128xf32, #tpu.memory_space<vmem>>, vector<16x128xf32>
      tpu.vector_store %arg7[%c0_15, %c0_16], %18 {strides = array<i32>} : memref<16x128xf32, #tpu.memory_space<vmem>>, vector<16x128xf32>,
    } else {
    }
    %c0_i32_9 = arith.constant 0 : i32
    %13 = arith.cmpi eq, %arg2, %c0_i32_9 : i32
    %14 = arith.extui %13 : i1 to i32
    %c0_i32_10 = arith.constant 0 : i32
    %15 = arith.cmpi ne, %14, %c0_i32_10 : i32
    scf.if %15 {
      %c0_11 = arith.constant 0 : index
      %c0_12 = arith.constant 0 : index
      %16 = vector.load %arg7[%c0_11, %c0_12] : memref<16x128xf32, #tpu.memory_space<vmem>>, vector<16x128xf32>
      %c0_13 = arith.constant 0 : index
      %c0_14 = arith.constant 0 : index
      %17 = vector.load %arg5[%c0_13, %c0_14] : memref<1x128xf32, #tpu.memory_space<vmem>>, vector<1x128xf32>
      %18 = vector.broadcast %17 : vector<1x128xf32> to vector<16x128xf32>
      %19 = arith.addf %16, %18 : vector<16x128xf32>
      %c0_15 = arith.constant 0 : index
      %c0_16 = arith.constant 0 : index
      %20 = vector.load %arg6[%c0_15, %c0_16] : memref<16x128xf32, #tpu.memory_space<vmem>>, vector<16x128xf32>
      tpu.vector_store %arg6[%c0_15, %c0_16], %19 {strides = array<i32>} : memref<16x128xf32, #tpu.memory_space<vmem>>, vector<16x128xf32>,
    } else {
    }
    return
  }
  func.func @transform_0(%arg0: i32, %arg1: i32, %arg2: i32) -> (i32, i32) {
    %c0_i32 = arith.constant 0 : i32
    return %arg0, %arg2 : i32, i32
  }
  func.func @transform_1(%arg0: i32, %arg1: i32, %arg2: i32) -> (i32, i32) {
    %c0_i32 = arith.constant 0 : i32
    return %arg2, %arg1 : i32, i32
  }
  func.func @transform_2(%arg0: i32, %arg1: i32, %arg2: i32) -> (i32, i32) {
    %c0_i32 = arith.constant 0 : i32
    %c0_i32_0 = arith.constant 0 : i32
    return %c0_i32, %arg1 : i32, i32
  }
  func.func @transform_3(%arg0: i32, %arg1: i32, %arg2: i32) -> (i32, i32) {
    %c0_i32 = arith.constant 0 : i32
    return %arg0, %arg1 : i32, i32
  }
}

</mosaic_0001>

<llo_original>
// kernel: tpu_custom_call.1
$region0: #{tpu_custom_call.1}
  #allocation0 [shape = 'u32[]', space=smem, size = 0x4, offset = 0x4, fixed_abs, tag = 'smem constant byte address 0x4 - core index']
  #allocation1 [shape = 'u32[144,128]{1,0:T(1,128)}', space=vmem, size = 0x12000, scoped, tag = 'internal scratch']
  #allocation2 [shape = 'f32[16,128]{1,0:T(8,128)}', space=vmem, size = 0x2000, scoped, tag = 'scratch operand']
  %s0 = inlined_call_operand.hbm [shape: f32[16,128], index: 0, kind: input, shape index: {}]
  %s1 = inlined_call_operand.hbm [shape: bf16[128,128], index: 1, kind: input, shape index: {}]
  %s2 = inlined_call_operand.vmem [shape: f32[1,128], index: 2, kind: input, shape index: {}]
  %s3 = inlined_call_operand.hbm [shape: f32[16,128], index: 3, kind: output, shape index: {}]
  %s4 = sld [smem:[#allocation0]]
  $region42: #{tpu_custom_call.1} parent=0
    _
  %s6 = ssub.s32 1, %s4
  %s7 = scalar_select 0, %s6, %s4
  $region1: #{tpu_custom_call.1} parent=0
    #allocation3 [shape = 'u8[8192]{0}', space=vmem, size = 0x2000, scoped, tag = 'input window, operand 0, single buffered']
    #allocation4 [shape = 's32[1]{0}', space=sflag, size = 0x4, scoped, tag = 'scoped memory for tpu_custom_call.1']
    #allocation5 [shape = 's32[1]{0}', space=sflag, size = 0x4, scoped, tag = 'scoped memory for tpu_custom_call.1']
    #allocation6 [shape = 'u8[32768]{0}', space=vmem, size = 0x8000, scoped, tag = 'input window, operand 1, single buffered']
    #allocation7 [shape = 's32[1]{0}', space=sflag, size = 0x4, scoped, tag = 'scoped memory for tpu_custom_call.1']
    #allocation8 [shape = 'u8[8192]{0}', space=vmem, size = 0x2000, scoped, tag = 'output window, operand 0, single buffered']
    %8 = vsyncpa [#allocation4], 0
    %9 = vsyncpa [#allocation7], 0
    %10 = vsyncpa [#allocation5], 0
    // Predicated region
    $region2: #{tpu_custom_call.1} parent=1 // pred_check
      _
    $region3: #{tpu_custom_call.1} parent=1 // pred_check_branch
      %12 = sbr.rel (0) target = $region5
    $region4: #{tpu_custom_call.1} parent=1 // pred_region
      %s14 = ssub.s32 256, 256
      %15 = vsyncadd [#allocation4], %s14
      %s16 = sshll.u32 [#allocation3], 4
      %s17 = int_to_ptr.vmem [resolvable:$true] %s16
      %22 = dma.hbm_to_vmem [thread:$0]  %s0, 256, %s17, [#allocation4], 128, 128, 8
    $region5: #{tpu_custom_call.1} parent=1 // pred_fallthru
      _
    // Predicated region
    $region6: #{tpu_custom_call.1} parent=1 // pred_check
      _
    $region7: #{tpu_custom_call.1} parent=1 // pred_check_branch
      %24 = sbr.rel (0) target = $region9
    $region8: #{tpu_custom_call.1} parent=1 // pred_region
      %s26 = ssub.s32 1024, 1024
      %27 = vsyncadd [#allocation7], %s26
      %s28 = sshll.u32 [#allocation6], 4
      %s29 = int_to_ptr.vmem [resolvable:$true] %s28
      %34 = dma.hbm_to_vmem [thread:$0]  %s1, 1024, %s29, [#allocation7], 64, 64, 4
    $region9: #{tpu_custom_call.1} parent=1 // pred_fallthru
      _
    // Predicated region
    $region10: #{tpu_custom_call.1} parent=1 // pred_check
      _
    $region11: #{tpu_custom_call.1} parent=1 // pred_check_branch
      %36 = sbr.rel (0) target = $region13
    $region12: #{tpu_custom_call.1} parent=1 // pred_region
      _
    $region13: #{tpu_custom_call.1} parent=1 // pred_fallthru
      _
    // Predicated region
    $region14: #{tpu_custom_call.1} parent=1 // pred_check
      _
    $region15: #{tpu_custom_call.1} parent=1 // pred_check_branch
      %38 = sbr.rel (0) target = $region17
    $region16: #{tpu_custom_call.1} parent=1 // pred_region
      %39 = dma.done [#allocation4], 256
    $region17: #{tpu_custom_call.1} parent=1 // pred_fallthru
      _
    // Predicated region
    $region18: #{tpu_custom_call.1} parent=1 // pred_check
      _
    $region19: #{tpu_custom_call.1} parent=1 // pred_check_branch
      %41 = sbr.rel (0) target = $region21
    $region20: #{tpu_custom_call.1} parent=1 // pred_region
      %42 = dma.done [#allocation7], 1024
    $region21: #{tpu_custom_call.1} parent=1 // pred_fallthru
      _
    %p44 = scmp.eq.s32.totalorder 0, 0
    // Predicated region
    $region22: #{tpu_custom_call.1} parent=1 // pred_check
      %p45 = pneg %p44
    $region23: #{tpu_custom_call.1} parent=1 // pred_check_branch
      %47 = sbr.rel (%p45) target = $region25
    $region24: #{tpu_custom_call.1} parent=1 // pred_region
      %48 = vst [vmem:[#allocation2] sm:$0xff] 0.0
      %49 = vst [vmem:[#allocation2 + $0x8] sm:$0xff] 0.0
    $region25: #{tpu_custom_call.1} parent=1 // pred_fallthru
      _
    %v50 = vld [vmem:[#allocation2] sm:$0xff]
    %v51 = vld [vmem:[#allocation2 + $0x8] sm:$0xff]
    %v52 = vld [vmem:[#allocation3] sm:$0xff]
    %v53 = vld [vmem:[#allocation3 + $0x8] sm:$0xff]
    %v54 = vpack.c.bf16 %v53, %v52
    %v55 = vld [vmem:[#allocation6] sm:$0xf]
    %v56 = vld [vmem:[#allocation6 + $0x4] sm:$0xf]
    %v57 = vld [vmem:[#allocation6 + $0x8] sm:$0xf]
    %v58 = vld [vmem:[#allocation6 + $0xc] sm:$0xf]
    %v59 = vld [vmem:[#allocation6 + $0x10] sm:$0xf]
    %v60 = vld [vmem:[#allocation6 + $0x14] sm:$0xf]
    %v61 = vld [vmem:[#allocation6 + $0x18] sm:$0xf]
    %v62 = vld [vmem:[#allocation6 + $0x1c] sm:$0xf]
    %v63 = vld [vmem:[#allocation6 + $0x20] sm:$0xf]
    %v64 = vld [vmem:[#allocation6 + $0x24] sm:$0xf]
    %v65 = vld [vmem:[#allocation6 + $0x28] sm:$0xf]
    %v66 = vld [vmem:[#allocation6 + $0x2c] sm:$0xf]
    %v67 = vld [vmem:[#allocation6 + $0x30] sm:$0xf]
    %v68 = vld [vmem:[#allocation6 + $0x34] sm:$0xf]
    %v69 = vld [vmem:[#allocation6 + $0x38] sm:$0xf]
    %v70 = vld [vmem:[#allocation6 + $0x3c] sm:$0xf]
    %v87 = vunpack.c.l.b16 %v55
    %v88 = vunpack.c.l.b16 %v56
    %v89 = vunpack.c.l.b16 %v57
    %v90 = vunpack.c.l.b16 %v58
    %v91 = vunpack.c.l.b16 %v59
    %v92 = vunpack.c.l.b16 %v60
    %v93 = vunpack.c.l.b16 %v61
    %v94 = vunpack.c.l.b16 %v62
    %v95 = vunpack.c.l.b16 %v63
    %v96 = vunpack.c.l.b16 %v64
    %v97 = vunpack.c.l.b16 %v65
    %v98 = vunpack.c.l.b16 %v66
    %v99 = vunpack.c.l.b16 %v67
    %v100 = vunpack.c.l.b16 %v68
    %v101 = vunpack.c.l.b16 %v69
    %v102 = vunpack.c.l.b16 %v70
    %v103 = vpack.c.b16 %v88, %v87
    %v104 = vpack.c.b16 %v90, %v89
    %v105 = vpack.c.b16 %v92, %v91
    %v106 = vpack.c.b16 %v94, %v93
    %v107 = vpack.c.b16 %v96, %v95
    %v108 = vpack.c.b16 %v98, %v97
    %v109 = vpack.c.b16 %v100, %v99
    %v110 = vpack.c.b16 %v102, %v101
    %119 = vmatprep.subr.bf16.mxu0 0
    %120 = vmatpush1.bf16.msra.mxu0 %v103
    %121 = vmatprep.subr.bf16.mxu0 0
    %122 = vmatpush1.bf16.msra.mxu0 %v104
    %123 = vmatprep.subr.bf16.mxu0 0
    %124 = vmatpush1.bf16.msra.mxu0 %v105
    %125 = vmatprep.subr.bf16.mxu0 0
    %126 = vmatpush1.bf16.msra.mxu0 %v106
    %127 = vmatprep.subr.bf16.mxu0 0
    %128 = vmatpush1.bf16.msra.mxu0 %v107
    %129 = vmatprep.subr.bf16.mxu0 0
    %130 = vmatpush1.bf16.msra.mxu0 %v108
    %131 = vmatprep.subr.bf16.mxu0 0
    %132 = vmatpush1.bf16.msra.mxu0 %v109
    %133 = vmatprep.subr.bf16.mxu0 0
    %134 = vmatpush1.bf16.msra.mxu0 %v110
    %135 = vmatprep.subr.bf16.mxu0 0
    %136 = vmatpush1.bf16.msra.mxu0 0
    %137 = vmatprep.subr.bf16.mxu0 0
    %138 = vmatpush1.bf16.msra.mxu0 0
    %139 = vmatprep.subr.bf16.mxu0 0
    %140 = vmatpush1.bf16.msra.mxu0 0
    %141 = vmatprep.subr.bf16.mxu0 0
    %142 = vmatpush1.bf16.msra.mxu0 0
    %143 = vmatprep.subr.bf16.mxu0 0
    %144 = vmatpush1.bf16.msra.mxu0 0
    %145 = vmatprep.subr.bf16.mxu0 0
    %146 = vmatpush1.bf16.msra.mxu0 0
    %147 = vmatprep.subr.bf16.mxu0 0
    %148 = vmatpush1.bf16.msra.mxu0 0
    %149 = vmatprep.subr.bf16.mxu0 0
    %150 = vmatpush1.bf16.msra.mxu0 0
    %151 = vmatprep.mubr.bf16.mxu0 0
    %152 = vmatmul.mubr.bf16.gmra.mrb[0].mxu0 %v54
    %v153 = vpop.f32.mrb[0].mxu0
    %v154 = vadd.f32 0.0, %v153
    %v155 = vpop.f32.mrb[0].mxu0
    %v156 = vpop.f32.mrb[0].mxu0
    %v157 = vadd.f32 0.0, %v156
    %v158 = vpop.f32.mrb[0].mxu0
    %159 = vdwg.mxu0
    %v160 = vadd.f32 %v50, %v154
    %v161 = vadd.f32 %v51, %v157
    %162 = vst [vmem:[#allocation2] sm:$0xff] %v160
    %163 = vst [vmem:[#allocation2 + $0x8] sm:$0xff] %v161
    %p164 = scmp.eq.s32.totalorder 0, 0
    // Predicated region
    $region26: #{tpu_custom_call.1} parent=1 // pred_check
      %p165 = pneg %p164
    $region27: #{tpu_custom_call.1} parent=1 // pred_check_branch
      %167 = sbr.rel (%p165) target = $region29
    $region28: #{tpu_custom_call.1} parent=1 // pred_region
      %v168 = vld [vmem:[#allocation2] sm:$0xff]
      %v169 = vld [vmem:[#allocation2 + $0x8] sm:$0xff]
      %v170 = vld [vmem:[#allocation3] sm:$0xff]
      %v171 = vld [vmem:[#allocation3 + $0x8] sm:$0xff]
      %v172 = vadd.f32 %v168, %v170
      %v173 = vadd.f32 %v169, %v171
      %174 = vst [vmem:[#allocation2] sm:$0xff] %v172
      %175 = vst [vmem:[#allocation2 + $0x8] sm:$0xff] %v173
    $region29: #{tpu_custom_call.1} parent=1 // pred_fallthru
      _
    // Predicated region
    $region30: #{tpu_custom_call.1} parent=1 // pred_check
      %p176 = pneg %p44
    $region31: #{tpu_custom_call.1} parent=1 // pred_check_branch
      %178 = sbr.rel (%p176) target = $region33
    $region32: #{tpu_custom_call.1} parent=1 // pred_region
      %v179 = vld [vmem:[#allocation2] sm:$0xff]
      %v180 = vld [vmem:[#allocation2 + $0x8] sm:$0xff]
      %v181 = vld [vmem:[%s2] sm:$0x1]
      %v183 = vlaneseq
      %v184 = vshrl.u32 %v183, 7
      %v185 = vsub.s32 0, %v184
      %v186 = vrot.slane %v181, %v185
      %v188 = vadd.f32 %v179, %v186
      %v189 = vadd.f32 %v180, %v186
      %190 = vst [vmem:[#allocation8] sm:$0xff] %v188
      %191 = vst [vmem:[#allocation8 + $0x8] sm:$0xff] %v189
    $region33: #{tpu_custom_call.1} parent=1 // pred_fallthru
      _
    // Predicated region
    $region34: #{tpu_custom_call.1} parent=1 // pred_check
      _
    $region35: #{tpu_custom_call.1} parent=1 // pred_check_branch
      %193 = sbr.rel (0) target = $region37
    $region36: #{tpu_custom_call.1} parent=1 // pred_region
      %s195 = ssub.s32 256, 256
      %196 = vsyncadd [#allocation5], %s195
      %s197 = sshll.u32 [#allocation8], 4
      %s198 = int_to_ptr.vmem [resolvable:$true] %s197
      %203 = dma.vmem_to_hbm [thread:$0]  %s198, 256, %s3, [#allocation5], 128, 128, 8
    $region37: #{tpu_custom_call.1} parent=1 // pred_fallthru
      _
    // Predicated region
    $region38: #{tpu_custom_call.1} parent=1 // pred_check
      _
    $region39: #{tpu_custom_call.1} parent=1 // pred_check_branch
      %205 = sbr.rel (0) target = $region41
    $region40: #{tpu_custom_call.1} parent=1 // pred_region
      %206 = dma.done [#allocation5], 256
    $region41: #{tpu_custom_call.1} parent=1 // pred_fallthru
      _
    %207 = vsyncpa [#allocation4], 1
    %208 = vsyncpa [#allocation7], 1
    %209 = vsyncpa [#allocation5], 1

</llo_original>
